<compile_context>
chip_gen: v7x
topology: tpu7x:2x2x1
jax: 0.10.0
libtpu: 0.0.40
codegen_flags: <defaults>
</compile_context>

<pallas_src>
import functools
import math

import jax
import jax.numpy as jnp
from jax.experimental import pallas as pl
from jax.experimental.pallas import tpu as pltpu

# Physical constants (scipy.constants values, hard-coded; deterministic, no I/O).
EPSILON_0 = 8.8541878128e-12
MU_0 = 1.25663706212e-06


def _maxwell_loss_kernel(ez_ref, eps_ref, out_ref, *, const_fac, use_roll, approx_recip):
    """One (TB, 2, H, W) ez slab + (TB, H, W) eps slab per grid step.

    Writes a lane-dense (1, 8, 128) partial-sum block (unmasked vst); the
    wrapper reads element [b, 0, 0] of each block and finishes the mean.
    """
    x = ez_ref[...]                        # (TB, 2, H, W) -- one contiguous DMA
    xr = x[:, 0].astype(jnp.float32)       # (TB, H, W) real
    xi = x[:, 1].astype(jnp.float32)       # (TB, H, W) imag
    eps = eps_ref[...].astype(jnp.float32)
    _, H, W = eps.shape

    # Exact (or EUP-approx) reciprocal instead of a VALU divide sequence.
    inv_eps = pl.reciprocal(eps, approx=approx_recip)

    if use_roll:
        # Lane-dense path: full-block XLU shifts, boundary rows/cols masked out.
        scale = const_fac * inv_eps

        def neg_lap(v):
            nbr = (pltpu.roll(v, 1, -1) + pltpu.roll(v, -1, -1)
                   + pltpu.roll(v, 1, -2) + pltpu.roll(v, -1, -2))
            return 4.0 * v - nbr

        dr = xr - neg_lap(xr) * scale
        di = xi - neg_lap(xi) * scale

        row = jax.lax.broadcasted_iota(jnp.int32, (1, H, W), 1)
        col = jax.lax.broadcasted_iota(jnp.int32, (1, H, W), 2)
        interior = (row >= 1) & (row <= H - 2) & (col >= 1) & (col <= W - 2)
        partial = jnp.sum(jnp.where(interior, jnp.sqrt(dr * dr + di * di), 0.0))
    else:
        # Fallback for shapes where a sub-128 lane rotate cannot lower:
        # aligned interior slices (proven correct path).
        scale = const_fac * inv_eps[:, 1:-1, 1:-1]

        def neg_lap_interior(v):
            c = v[:, 1:-1, 1:-1]
            return (4.0 * c
                    - v[:, :-2, 1:-1] - v[:, 2:, 1:-1]
                    - v[:, 1:-1, :-2] - v[:, 1:-1, 2:])

        dr = xr[:, 1:-1, 1:-1] - neg_lap_interior(xr) * scale
        di = xi[:, 1:-1, 1:-1] - neg_lap_interior(xi) * scale
        partial = jnp.sum(jnp.sqrt(dr * dr + di * di))

    # Lane-dense broadcast store (no masked vst); wrapper picks [b, 0, 0].
    out_ref[...] = jnp.full(out_ref.shape, partial, dtype=out_ref.dtype)


def maxwell_loss(ez, eps, *, lambda0, dl, input_dtype=None, approx_reciprocal=False):
    """Pallas implementation of MaxwellLoss(lambda0, dl, loss_fn=l1, method='explicit').

    input_dtype: optionally cast inputs (e.g. jnp.bfloat16) to halve HBM traffic
      on this HBM-bound kernel; accumulation stays f32.  Default keeps f32.
    approx_reciprocal: use the EUP approximate reciprocal for 1/eps (training-
      grade accuracy, ~1e-3 rel err); default False for exactness.
    """
    B, C, H, W = ez.shape
    assert C == 2, "ez must be (B, 2, H, W) real/imag"
    assert eps.shape == (B, H, W)
    assert H >= 3 and W >= 3, "interior (1:-1, 1:-1) is empty for H or W < 3"

    c0 = math.sqrt(1.0 / EPSILON_0 / MU_0)
    omega = 2.0 * math.pi * c0 / lambda0
    const_fac = 1.0 / dl ** 2 / omega ** 2 / MU_0 / EPSILON_0
    inv_count = 1.0 / float(B * (H - 2) * (W - 2))

    in_dtype = jnp.float32 if input_dtype is None else input_dtype
    ez = ez.astype(in_dtype)
    eps = eps.astype(in_dtype)

    use_roll = (W % 128 == 0) and (H % 8 == 0)

    # --- VMEM sizing with (8,128)-padded footprints ---------------------------
    try:
        vmem_cap = int(pltpu.get_tpu_info().vmem_capacity_bytes)
    except Exception:
        vmem_cap = 64 * 1024 * 1024            # conservative (v7x per-core)
    vmem_limit = min((vmem_cap * 3) // 4, 96 * 1024 * 1024)

    hp = -(-H // 8) * 8                        # padded sublane extent
    wp = -(-W // 128) * 128                    # padded lane extent
    plane_in = hp * wp * jnp.dtype(in_dtype).itemsize   # one padded (H, W) input plane
    plane_f32 = hp * wp * 4
    # 3 input planes / batch, double-buffered by the pipeline, plus an estimate
    # of in-kernel f32 temporaries (the slice fallback materializes more).
    tmp_planes = 6 if use_roll else 12
    per_batch = 3 * 2 * plane_in + tmp_planes * plane_f32

    budget = (vmem_limit * 2) // 3
    tb_cap = max(1, min(B, budget // per_batch))
    # Keep >= 4 grid steps when B allows so double-buffering has DMAs to overlap.
    min_steps = min(B, 4)
    tb_cap = max(1, min(tb_cap, B // min_steps))
    tb = 1
    for cand in range(tb_cap, 0, -1):
        if B % cand == 0:
            tb = cand
            break
    nb = B // tb

    kernel = functools.partial(_maxwell_loss_kernel, const_fac=const_fac,
                               use_roll=use_roll, approx_recip=approx_reciprocal)

    partials = pl.pallas_call(
        kernel,
        out_shape=jax.ShapeDtypeStruct((nb, 8, 128), jnp.float32),
        grid_spec=pltpu.PrefetchScalarGridSpec(
            num_scalar_prefetch=0,
            grid=(nb,),
            in_specs=[
                # ez fetched once per step as a single contiguous block.
                pl.BlockSpec((tb, 2, H, W), lambda b: (b, 0, 0, 0)),
                pl.BlockSpec((tb, H, W), lambda b: (b, 0, 0)),
            ],
            out_specs=pl.BlockSpec((1, 8, 128), lambda b: (b, 0, 0)),
        ),
        compiler_params=pltpu.CompilerParams(
            dimension_semantics=("parallel",),       # no cross-step carry
            vmem_limit_bytes=int(vmem_limit)),
    )(ez, eps)

    # Final reduction of per-block partial sums + mean, in plain JAX.
    return jnp.sum(partials[:, 0, 0]) * inv_count


def maxwell_loss_ref(ez, eps, *, lambda0, dl):
    """Plain-JAX reference mirroring the PyTorch module (explicit method)."""
    c0 = math.sqrt(1.0 / EPSILON_0 / MU_0)
    omega = 2.0 * math.pi * c0 / lambda0
    const_fac = 1.0 / dl ** 2 / omega ** 2 / MU_0 / EPSILON_0

    ez_c = ez[:, 0].astype(jnp.complex64) + 1j * ez[:, 1].astype(jnp.complex64)

    def dxb(x):
        xp = jnp.pad(x, ((0, 0), (1, 0), (0, 0)))
        return xp[:, 1:, :] - xp[:, :-1, :]

    def dyb(x):
        xp = jnp.pad(x, ((0, 0), (0, 0), (1, 0)))
        return xp[:, :, 1:] - xp[:, :, :-1]

    def dxf(x):
        xp = jnp.pad(x, ((0, 0), (0, 1), (0, 0)))
        return xp[:, :-1, :] - xp[:, 1:, :]

    def dyf(x):
        xp = jnp.pad(x, ((0, 0), (0, 0), (0, 1)))
        return xp[:, :, :-1] - xp[:, :, 1:]

    hx = 1j * dyb(ez_c)
    hy = -1j * dxb(ez_c)
    ez_hat = 1j * (dxf(hy) - dyf(hx)) / eps * const_fac
    diff = ez_c[:, 1:-1, 1:-1] - ez_hat[:, 1:-1, 1:-1]
    return jnp.mean(jnp.abs(diff))


if __name__ == "__main__":
    # Small deterministic self-test.  (W=16 exercises the aligned-slice fallback;
    # production shapes with W % 128 == 0 and H % 8 == 0 take the roll path.)
    B, H, W = 2, 16, 16
    lambda0 = 1.55e-6
    dl = 0.05e-6

    key = jax.random.PRNGKey(0)
    k1, k2 = jax.random.split(key)
    ez = jax.random.normal(k1, (B, 2, H, W), dtype=jnp.float32)
    eps = 1.0 + 11.0 * jax.random.uniform(k2, (B, H, W), dtype=jnp.float32)

    loss = maxwell_loss(ez, eps, lambda0=lambda0, dl=dl)
    loss = jax.block_until_ready(loss)

    ref = maxwell_loss_ref(ez, eps, lambda0=lambda0, dl=dl)
    assert jnp.allclose(loss, ref, rtol=1e-4, atol=1e-4), (loss, ref)

    print("KERNEL_OK")
</pallas_src>

<mosaic_0001>
module attributes {stable_mosaic.version = 11 : i64} {
  func.func @_maxwell_loss_kernel(%arg0: i32, %arg1: memref<1x2x16x16xf32, #tpu.memory_space<vmem>>, %arg2: memref<1x16x16xf32, #tpu.memory_space<vmem>>, %arg3: memref<1x8x128xf32, #tpu.memory_space<vmem>>) attributes {dimension_semantics = [#tpu.dimension_semantics<parallel>], iteration_bounds = array<i64: 2>, scalar_prefetch = 0 : i64, scratch_operands = 0 : i64, tpu.core_type = #tpu.core_type<tc>, window_params = [{transform_indices = @transform_0, window_bounds = array<i64: 1, 2, 16, 16>}, {transform_indices = @transform_1, window_bounds = array<i64: 1, 16, 16>}, {transform_indices = @transform_2, window_bounds = array<i64: 1, 8, 128>}]} {
    %c0 = arith.constant 0 : index
    %c0_0 = arith.constant 0 : index
    %c0_1 = arith.constant 0 : index
    %c0_2 = arith.constant 0 : index
    %0 = vector.load %arg1[%c0, %c0_0, %c0_1, %c0_2] : memref<1x2x16x16xf32, #tpu.memory_space<vmem>>, vector<1x2x16x16xf32>
    %1 = vector.extract_strided_slice %0 {offsets = [0, 0, 0, 0], sizes = [1, 1, 16, 16], strides = [1, 1, 1, 1]} : vector<1x2x16x16xf32> to vector<1x1x16x16xf32>
    %2 = vector.shape_cast %1 : vector<1x1x16x16xf32> to vector<1x16x16xf32>
    %3 = vector.extract_strided_slice %0 {offsets = [0, 1, 0, 0], sizes = [1, 1, 16, 16], strides = [1, 1, 1, 1]} : vector<1x2x16x16xf32> to vector<1x1x16x16xf32>
    %4 = vector.shape_cast %3 : vector<1x1x16x16xf32> to vector<1x16x16xf32>
    %c0_3 = arith.constant 0 : index
    %c0_4 = arith.constant 0 : index
    %c0_5 = arith.constant 0 : index
    %5 = vector.load %arg2[%c0_3, %c0_4, %c0_5] : memref<1x16x16xf32, #tpu.memory_space<vmem>>, vector<1x16x16xf32>
    %6 = tpu.reciprocal %5 : vector<1x16x16xf32> -> vector<1x16x16xf32>
    %7 = vector.extract_strided_slice %6 {offsets = [0, 1, 1], sizes = [1, 14, 14], strides = [1, 1, 1]} : vector<1x16x16xf32> to vector<1x14x14xf32>
    %cst = arith.constant 24.3424149 : f32
    %8 = vector.broadcast %cst : f32 to vector<1x14x14xf32>
    %9 = arith.mulf %8, %7 : vector<1x14x14xf32>
    %10 = vector.extract_strided_slice %2 {offsets = [0, 1, 1], sizes = [1, 14, 14], strides = [1, 1, 1]} : vector<1x16x16xf32> to vector<1x14x14xf32>
    %11 = vector.extract_strided_slice %2 {offsets = [0, 1, 1], sizes = [1, 14, 14], strides = [1, 1, 1]} : vector<1x16x16xf32> to vector<1x14x14xf32>
    %cst_6 = arith.constant 4.000000e+00 : f32
    %12 = vector.broadcast %cst_6 : f32 to vector<1x14x14xf32>
    %13 = arith.mulf %12, %11 : vector<1x14x14xf32>
    %14 = vector.extract_strided_slice %2 {offsets = [0, 0, 1], sizes = [1, 14, 14], strides = [1, 1, 1]} : vector<1x16x16xf32> to vector<1x14x14xf32>
    %15 = arith.subf %13, %14 : vector<1x14x14xf32>
    %16 = vector.extract_strided_slice %2 {offsets = [0, 2, 1], sizes = [1, 14, 14], strides = [1, 1, 1]} : vector<1x16x16xf32> to vector<1x14x14xf32>
    %17 = arith.subf %15, %16 : vector<1x14x14xf32>
    %18 = vector.extract_strided_slice %2 {offsets = [0, 1, 0], sizes = [1, 14, 14], strides = [1, 1, 1]} : vector<1x16x16xf32> to vector<1x14x14xf32>
    %19 = arith.subf %17, %18 : vector<1x14x14xf32>
    %20 = vector.extract_strided_slice %2 {offsets = [0, 1, 2], sizes = [1, 14, 14], strides = [1, 1, 1]} : vector<1x16x16xf32> to vector<1x14x14xf32>
    %21 = arith.subf %19, %20 : vector<1x14x14xf32>
    %22 = arith.mulf %21, %9 : vector<1x14x14xf32>
    %23 = arith.subf %10, %22 : vector<1x14x14xf32>
    %24 = vector.extract_strided_slice %4 {offsets = [0, 1, 1], sizes = [1, 14, 14], strides = [1, 1, 1]} : vector<1x16x16xf32> to vector<1x14x14xf32>
    %25 = vector.extract_strided_slice %4 {offsets = [0, 1, 1], sizes = [1, 14, 14], strides = [1, 1, 1]} : vector<1x16x16xf32> to vector<1x14x14xf32>
    %cst_7 = arith.constant 4.000000e+00 : f32
    %26 = vector.broadcast %cst_7 : f32 to vector<1x14x14xf32>
    %27 = arith.mulf %26, %25 : vector<1x14x14xf32>
    %28 = vector.extract_strided_slice %4 {offsets = [0, 0, 1], sizes = [1, 14, 14], strides = [1, 1, 1]} : vector<1x16x16xf32> to vector<1x14x14xf32>
    %29 = arith.subf %27, %28 : vector<1x14x14xf32>
    %30 = vector.extract_strided_slice %4 {offsets = [0, 2, 1], sizes = [1, 14, 14], strides = [1, 1, 1]} : vector<1x16x16xf32> to vector<1x14x14xf32>
    %31 = arith.subf %29, %30 : vector<1x14x14xf32>
    %32 = vector.extract_strided_slice %4 {offsets = [0, 1, 0], sizes = [1, 14, 14], strides = [1, 1, 1]} : vector<1x16x16xf32> to vector<1x14x14xf32>
    %33 = arith.subf %31, %32 : vector<1x14x14xf32>
    %34 = vector.extract_strided_slice %4 {offsets = [0, 1, 2], sizes = [1, 14, 14], strides = [1, 1, 1]} : vector<1x16x16xf32> to vector<1x14x14xf32>
    %35 = arith.subf %33, %34 : vector<1x14x14xf32>
    %36 = arith.mulf %35, %9 : vector<1x14x14xf32>
    %37 = arith.subf %24, %36 : vector<1x14x14xf32>
    %38 = arith.mulf %23, %23 : vector<1x14x14xf32>
    %39 = arith.mulf %37, %37 : vector<1x14x14xf32>
    %40 = arith.addf %38, %39 : vector<1x14x14xf32>
    %41 = math.sqrt %40 : vector<1x14x14xf32>
    %42 = vector.shape_cast %41 : vector<1x14x14xf32> to vector<1x1x14x14xf32>
    %cst_8 = arith.constant dense<0.000000e+00> : vector<1xf32>
    %43 = vector.multi_reduction <add>, %42, %cst_8 [1, 2, 3] : vector<1x1x14x14xf32> to vector<1xf32>
    %44 = vector.shape_cast %43 : vector<1xf32> to vector<1x1x1x1xf32>
    %45 = vector.extract %44[0, 0, 0, 0] : f32 from vector<1x1x1x1xf32>
    %46 = vector.broadcast %45 : f32 to vector<1x8x128xf32>
    %c0_9 = arith.constant 0 : index
    %c0_10 = arith.constant 0 : index
    %c0_11 = arith.constant 0 : index
    %47 = vector.load %arg3[%c0_9, %c0_10, %c0_11] : memref<1x8x128xf32, #tpu.memory_space<vmem>>, vector<1x8x128xf32>
    tpu.vector_store %arg3[%c0_9, %c0_10, %c0_11], %46 {strides = array<i32>} : memref<1x8x128xf32, #tpu.memory_space<vmem>>, vector<1x8x128xf32>,
    return
  }
  func.func @transform_0(%arg0: i32) -> (i32, i32, i32, i32) {
    %c0_i32 = arith.constant 0 : i32
    %c0_i32_0 = arith.constant 0 : i32
    %c0_i32_1 = arith.constant 0 : i32
    %c0_i32_2 = arith.constant 0 : i32
    return %arg0, %c0_i32, %c0_i32_0, %c0_i32_1 : i32, i32, i32, i32
  }
  func.func @transform_1(%arg0: i32) -> (i32, i32, i32) {
    %c0_i32 = arith.constant 0 : i32
    %c0_i32_0 = arith.constant 0 : i32
    %c0_i32_1 = arith.constant 0 : i32
    return %arg0, %c0_i32, %c0_i32_0 : i32, i32, i32
  }
  func.func @transform_2(%arg0: i32) -> (i32, i32, i32) {
    %c0_i32 = arith.constant 0 : i32
    %c0_i32_0 = arith.constant 0 : i32
    %c0_i32_1 = arith.constant 0 : i32
    return %arg0, %c0_i32, %c0_i32_0 : i32, i32, i32
  }
}

</mosaic_0001>

<llo_original>
// kernel: tpu_custom_call.1
$region0: #{tpu_custom_call.1}
  #allocation0 [shape = 'u32[]', space=smem, size = 0x4, offset = 0x4, fixed_abs, tag = 'smem constant byte address 0x4 - core index']
  #allocation1 [shape = 'u32[144,128]{1,0:T(1,128)}', space=vmem, size = 0x12000, scoped, tag = 'internal scratch']
  %s0 = inlined_call_operand.hbm [shape: f32[2,2,16,16], index: 0, kind: input, shape index: {}]
  %s1 = inlined_call_operand.hbm [shape: f32[2,16,16], index: 1, kind: input, shape index: {}]
  %s2 = inlined_call_operand.hbm [shape: f32[2,8,128], index: 2, kind: output, shape index: {}]
  %s3 = sld [smem:[#allocation0]]
  $region49: #{tpu_custom_call.1} parent=0
    _
  %s5 = ssub.s32 1, %s3
  %s6 = scalar_select 0, %s5, %s3
  $region1: #{tpu_custom_call.1} parent=0
    #allocation2 [shape = 'u8[32768]{0}', space=vmem, size = 0x8000, scoped, tag = 'input window, operand 0']
    #allocation3 [shape = 's32[2]{0}', space=sflag, size = 0x8, scoped, tag = 'scoped memory for tpu_custom_call.1']
    #allocation4 [shape = 's32[2]{0}', space=sflag, size = 0x8, scoped, tag = 'scoped memory for tpu_custom_call.1']
    #allocation5 [shape = 'u8[16384]{0}', space=vmem, size = 0x4000, scoped, tag = 'input window, operand 1']
    #allocation6 [shape = 's32[2]{0}', space=sflag, size = 0x8, scoped, tag = 'scoped memory for tpu_custom_call.1']
    #allocation7 [shape = 'u8[8192]{0}', space=vmem, size = 0x2000, scoped, tag = 'output window, operand 0']
    %7 = vsyncpa [#allocation3], 0
    %s8 = scalar_lea.sflag [#allocation3], 1
    %9 = vsyncpa %s8, 0
    %10 = vsyncpa [#allocation6], 0
    %s11 = scalar_lea.sflag [#allocation6], 1
    %12 = vsyncpa %s11, 0
    %13 = vsyncpa [#allocation4], 0
    %s14 = scalar_lea.sflag [#allocation4], 1
    %15 = vsyncpa %s14, 0
    loop: start=0, step=1, limit=4
    $region2: #{tpu_custom_call.1} parent=1 // loop_pre_header
      _
    $region3: #{tpu_custom_call.1} parent=1 // loop_header
      %s17 = sphi 0, %s21
      %p18 = scmp.ge.s32.totalorder %s17, 4
      %s27 = sphi 0, %s29
      %s30 = sphi 0, %s27
      %s31 = sphi 0, %s30
      %s47 = sphi 0, %s31
      %s53 = sphi 0, %s55
      %s56 = sphi 0, %s53
      %s57 = sphi 0, %s56
      %s73 = sphi 0, %s57
      %s79 = sphi 0, %s81
      %s82 = sphi 0, %s79
      %s83 = sphi 0, %s82
      %s99 = sphi 0, %s83
    $region4: #{tpu_custom_call.1} parent=1 // loop_header_branch
      %20 = sbr.rel (%p18) target = $region8
    $region5: #{tpu_custom_call.1} parent=1 // loop_body
      %s22 = ssub.s32 %s17, 1
      %s23 = ssub.s32 %s17, 2
      %s24 = sadd.s32 %s17, 1
      %s25 = ssub.s32 %s17, %s24
      %p26 = scmp.eq.s32.totalorder %s25, 0
      %s28 = sadd.s32 %s27, 1
      %s29 = scalar_select %p26, %s27, %s28
      %p32 = pneg %p26
      %p33 = scmp.eq.s32.totalorder %s17, 1
      %p34 = por %p32, %p33
      %p35 = scmp.ne.s32.totalorder %s27, %s30
      %p36 = scmp.eq.s32.totalorder %s17, 0
      %p37 = por %p35, %p36
      %p38 = scmp.ne.s32.totalorder %s27, %s30
      %p39 = scmp.eq.s32.totalorder %s22, 1
      %p40 = por %p38, %p39
      %p41 = scmp.ne.s32.totalorder %s30, %s31
      %p42 = scmp.eq.s32.totalorder %s22, 0
      %p43 = por %p41, %p42
      %p44 = scmp.ne.s32.totalorder %s30, %s31
      %p45 = scmp.eq.s32.totalorder %s23, 1
      %p46 = por %p44, %p45
      %p48 = scmp.ne.s32.totalorder %s31, %s47
      %p49 = scmp.eq.s32.totalorder %s23, 0
      %p50 = por %p48, %p49
      %s51 = ssub.s32 %s17, %s24
      %p52 = scmp.eq.s32.totalorder %s51, 0
      %s54 = sadd.s32 %s53, 1
      %s55 = scalar_select %p52, %s53, %s54
      %p58 = pneg %p52
      %p59 = scmp.eq.s32.totalorder %s17, 1
      %p60 = por %p58, %p59
      %p61 = scmp.ne.s32.totalorder %s53, %s56
      %p62 = scmp.eq.s32.totalorder %s17, 0
      %p63 = por %p61, %p62
      %p64 = scmp.ne.s32.totalorder %s53, %s56
      %p65 = scmp.eq.s32.totalorder %s22, 1
      %p66 = por %p64, %p65
      %p67 = scmp.ne.s32.totalorder %s56, %s57
      %p68 = scmp.eq.s32.totalorder %s22, 0
      %p69 = por %p67, %p68
      %p70 = scmp.ne.s32.totalorder %s56, %s57
      %p71 = scmp.eq.s32.totalorder %s23, 1
      %p72 = por %p70, %p71
      %p74 = scmp.ne.s32.totalorder %s57, %s73
      %p75 = scmp.eq.s32.totalorder %s23, 0
      %p76 = por %p74, %p75
      %s77 = ssub.s32 %s17, %s24
      %p78 = scmp.eq.s32.totalorder %s77, 0
      %s80 = sadd.s32 %s79, 1
      %s81 = scalar_select %p78, %s79, %s80
      %p84 = pneg %p78
      %p85 = scmp.eq.s32.totalorder %s17, 1
      %p86 = por %p84, %p85
      %p87 = scmp.ne.s32.totalorder %s79, %s82
      %p88 = scmp.eq.s32.totalorder %s17, 0
      %p89 = por %p87, %p88
      %p90 = scmp.ne.s32.totalorder %s79, %s82
      %p91 = scmp.eq.s32.totalorder %s22, 1
      %p92 = por %p90, %p91
      %p93 = scmp.ne.s32.totalorder %s82, %s83
      %p94 = scmp.eq.s32.totalorder %s22, 0
      %p95 = por %p93, %p94
      %p96 = scmp.ne.s32.totalorder %s82, %s83
      %p97 = scmp.eq.s32.totalorder %s23, 1
      %p98 = por %p96, %p97
      %p100 = scmp.ne.s32.totalorder %s83, %s99
      %p101 = scmp.eq.s32.totalorder %s23, 0
      %p102 = por %p100, %p101
      %p103 = scmp.le.s32.totalorder 1, %s17
      %p104 = scmp.lt.s32.totalorder %s17, 3
      %p105 = pnand %p103, %p104
      %p106 = pneg %p105
      // Predicated region
      $region9: #{tpu_custom_call.1} parent=5 // pred_check
        _
      $region10: #{tpu_custom_call.1} parent=5 // pred_check_branch
        %108 = sbr.rel (%p105) target = $region12
      $region11: #{tpu_custom_call.1} parent=5 // pred_region
        %s109 = ssub.s32 %s17, 1
      $region12: #{tpu_custom_call.1} parent=5 // pred_fallthru
        _
      %p110 = scmp.lt.s32.totalorder %s17, 2
      // Predicated region
      $region13: #{tpu_custom_call.1} parent=5 // pred_check
        %p111 = pneg %p110
      $region14: #{tpu_custom_call.1} parent=5 // pred_check_branch
        %113 = sbr.rel (%p111) target = $region16
      $region15: #{tpu_custom_call.1} parent=5 // pred_region
        // Predicated region
        $region17: #{tpu_custom_call.1} parent=15 // pred_check
          %p114 = pneg %p37
        $region18: #{tpu_custom_call.1} parent=15 // pred_check_branch
          %116 = sbr.rel (%p114) target = $region20
        $region19: #{tpu_custom_call.1} parent=15 // pred_region
          %s117 = sand.u32 %s27, 1
          %s118 = scalar_lea.sflag [#allocation3], %s117
          %s119 = sand.u32 %s27, 1
          %s120 = smul.addr %s119, 32
          %s121 = scalar_lea.vmem [#allocation2], %s120
          %s123 = ssub.s32 512, 512
          %124 = vsyncadd %s118, %s123
          %s125 = smul.addr %s17, 4
          %s126 = smul.addr %s125, 128
          %s127 = scalar_lea.hbm %s0, %s126
          %s128 = sshll.u32 %s121, 4
          %s129 = int_to_ptr.vmem [resolvable:$true] %s128
          %134 = dma.hbm_to_vmem [thread:$0]  %s127, 512, %s129, %s118, 128, 128, 8
        $region20: #{tpu_custom_call.1} parent=15 // pred_fallthru
          _
        // Predicated region
        $region21: #{tpu_custom_call.1} parent=15 // pred_check
          %p135 = pneg %p63
        $region22: #{tpu_custom_call.1} parent=15 // pred_check_branch
          %137 = sbr.rel (%p135) target = $region24
        $region23: #{tpu_custom_call.1} parent=15 // pred_region
          %s138 = sand.u32 %s53, 1
          %s139 = scalar_lea.sflag [#allocation6], %s138
          %s140 = sand.u32 %s53, 1
          %s141 = smul.addr %s140, 16
          %s142 = scalar_lea.vmem [#allocation5], %s141
          %s144 = ssub.s32 256, 256
          %145 = vsyncadd %s139, %s144
          %s146 = smul.addr %s17, 2
          %s147 = smul.addr %s146, 128
          %s148 = scalar_lea.hbm %s1, %s147
          %s149 = sshll.u32 %s142, 4
          %s150 = int_to_ptr.vmem [resolvable:$true] %s149
          %155 = dma.hbm_to_vmem [thread:$0]  %s148, 256, %s150, %s139, 128, 128, 8
        $region24: #{tpu_custom_call.1} parent=15 // pred_fallthru
          _
      $region16: #{tpu_custom_call.1} parent=5 // pred_fallthru
        _
      %p156 = scmp.le.s32.totalorder 1, %s17
      %p157 = scmp.lt.s32.totalorder %s17, 3
      %p158 = pnand %p156, %p157
      %p159 = pneg %p158
      // Predicated region
      $region25: #{tpu_custom_call.1} parent=5 // pred_check
        _
      $region26: #{tpu_custom_call.1} parent=5 // pred_check_branch
        %161 = sbr.rel (%p158) target = $region28
      $region27: #{tpu_custom_call.1} parent=5 // pred_region
        %s162 = ssub.s32 %s17, 1
        %s163 = sand.u32 %s30, 1
        %s164 = scalar_lea.sflag [#allocation3], %s163
        %s165 = sand.u32 %s30, 1
        %s166 = smul.addr %s165, 32
        %s167 = scalar_lea.vmem [#allocation2], %s166
        // Predicated region
        $region29: #{tpu_custom_call.1} parent=27 // pred_check
          %p168 = pneg %p43
        $region30: #{tpu_custom_call.1} parent=27 // pred_check_branch
          %170 = sbr.rel (%p168) target = $region32
        $region31: #{tpu_custom_call.1} parent=27 // pred_region
          %171 = dma.done %s164, 512
        $region32: #{tpu_custom_call.1} parent=27 // pred_fallthru
          _
        %s172 = sand.u32 %s56, 1
        %s173 = scalar_lea.sflag [#allocation6], %s172
        %s174 = sand.u32 %s56, 1
        %s175 = smul.addr %s174, 16
        %s176 = scalar_lea.vmem [#allocation5], %s175
        // Predicated region
        $region33: #{tpu_custom_call.1} parent=27 // pred_check
          %p177 = pneg %p69
        $region34: #{tpu_custom_call.1} parent=27 // pred_check_branch
          %179 = sbr.rel (%p177) target = $region36
        $region35: #{tpu_custom_call.1} parent=27 // pred_region
          %180 = dma.done %s173, 256
        $region36: #{tpu_custom_call.1} parent=27 // pred_fallthru
          _
        %s181 = sand.u32 %s30, 1
        %s182 = scalar_lea.sflag [#allocation3], %s181
        %s183 = sand.u32 %s30, 1
        %s184 = smul.addr %s183, 32
        %s185 = scalar_lea.vmem [#allocation2], %s184
        %p186 = pneg %p43
        %p187 = pneg %p40
        %s188 = sand.u32 %s56, 1
        %s189 = scalar_lea.sflag [#allocation6], %s188
        %s190 = sand.u32 %s56, 1
        %s191 = smul.addr %s190, 16
        %s192 = scalar_lea.vmem [#allocation5], %s191
        %p193 = pneg %p69
        %p194 = pneg %p66
        %p195 = pneg %p95
        %p196 = pneg %p92
        %s197 = sand.u32 %s82, 1
        %s198 = scalar_lea.sflag [#allocation4], %s197
        %s199 = sand.u32 %s82, 1
        %s200 = smul.addr %s199, 8
        %s201 = scalar_lea.vmem [#allocation7], %s200
        %v202 = vld [vmem:[%s167] sm:$0xff]
        %v203 = vld [vmem:[%s167 + $0x8] sm:$0xff]
        %v204 = vld [vmem:[%s167 + $0x10] sm:$0xff]
        %v205 = vld [vmem:[%s167 + $0x18] sm:$0xff]
        %v206 = vld [vmem:[%s176] sm:$0xff]
        %v207 = vld [vmem:[%s176 + $0x8] sm:$0xff]
        %v208 = vrcp.pop %v206
        %v209 = vrcp.pop %v207
        %v210 = vmul.f32 %v208, 24.342415
        %v211 = vmul.f32 %v209, 24.342415
        %v212 = vmul.f32 %v202, 4.0
        %v213 = vmul.f32 %v203, 4.0
        %vm216 = vcmask 1040384
        %v217 = vrot.slane %v202, 7
        %v218 = vrot.slane %v203, 7
        %v219 = vsel %vm216, %v217, %v218
        %v222 = vsub.f32 %v212, %v217
        %v223 = vsub.f32 %v213, %v219
        %vm224 = vcmask 1046528
        %v225 = vrot.slane %v202, 1
        %v226 = vrot.slane %v203, 1
        %v227 = vsel %vm224, %v225, %v226
        %v230 = vsub.f32 %v222, %v227
        %v231 = vsub.f32 %v223, %v226
        %232 = vrot.lane.b32.xlu0 %v202, 1
        %v233 = vpop.permute.xlu0 %232
        %234 = vrot.lane.b32.xlu0 %v203, 1
        %v235 = vpop.permute.xlu0 %234
        %v238 = vsub.f32 %v230, %v233
        %v239 = vsub.f32 %v231, %v235
        %240 = vrot.lane.b32.xlu0 %v202, 127
        %v241 = vpop.permute.xlu0 %240
        %242 = vrot.lane.b32.xlu0 %v203, 127
        %v243 = vpop.permute.xlu0 %242
        %v246 = vsub.f32 %v238, %v241
        %v247 = vsub.f32 %v239, %v243
        %v248 = vmul.f32 %v246, %v210
        %v249 = vmul.f32 %v247, %v211
        %v250 = vsub.f32 %v202, %v248
        %v251 = vsub.f32 %v203, %v249
        %v252 = vmul.f32 %v204, 4.0
        %v253 = vmul.f32 %v205, 4.0
        %v256 = vrot.slane %v204, 7
        %v257 = vrot.slane %v205, 7
        %v258 = vsel %vm216, %v256, %v257
        %v261 = vsub.f32 %v252, %v256
        %v262 = vsub.f32 %v253, %v258
        %v263 = vrot.slane %v204, 1
        %v264 = vrot.slane %v205, 1
        %v265 = vsel %vm224, %v263, %v264
        %v268 = vsub.f32 %v261, %v265
        %v269 = vsub.f32 %v262, %v264
        %270 = vrot.lane.b32.xlu0 %v204, 1
        %v271 = vpop.permute.xlu0 %270
        %272 = vrot.lane.b32.xlu0 %v205, 1
        %v273 = vpop.permute.xlu0 %272
        %v276 = vsub.f32 %v268, %v271
        %v277 = vsub.f32 %v269, %v273
        %278 = vrot.lane.b32.xlu0 %v204, 127
        %v279 = vpop.permute.xlu0 %278
        %280 = vrot.lane.b32.xlu0 %v205, 127
        %v281 = vpop.permute.xlu0 %280
        %v284 = vsub.f32 %v276, %v279
        %v285 = vsub.f32 %v277, %v281
        %v286 = vmul.f32 %v284, %v210
        %v287 = vmul.f32 %v285, %v211
        %v288 = vsub.f32 %v204, %v286
        %v289 = vsub.f32 %v205, %v287
        %v290 = vmul.f32 %v250, %v250
        %v291 = vmul.f32 %v251, %v251
        %v292 = vmul.f32 %v288, %v288
        %v293 = vmul.f32 %v289, %v289
        %v294 = vadd.f32 %v290, %v292
        %v295 = vadd.f32 %v291, %v293
        %v296 = vrsqrt.pop %v294
        %v297 = vmul.f32 %v294, %v296
        %vm298 = vcmp.eq.f32.partialorder %v294, inf
        %v299 = vsel %vm298, %v294, %v297
        %vm300 = vcmp.eq.f32.partialorder %v294, 0.0
        %v301 = vand.u32 %v294, 2147483648
        %v302 = vsel %vm300, %v301, %v299
        %v303 = vrsqrt.pop %v295
        %v304 = vmul.f32 %v295, %v303
        %vm305 = vcmp.eq.f32.partialorder %v295, inf
        %v306 = vsel %vm305, %v295, %v304
        %vm307 = vcmp.eq.f32.partialorder %v295, 0.0
        %v308 = vand.u32 %v295, 2147483648
        %v309 = vsel %vm307, %v308, %v306
        %v312 = vrot.slane %v302, 1
        %v313 = vrot.slane %v309, 1
        %v314 = vsel %vm224, %v312, %v313
        %315 = vrot.lane.b32.xlu0 %v314, 127
        %v316 = vpop.permute.xlu0 %315
        %317 = vrot.lane.b32.xlu0 %v313, 127
        %v318 = vpop.permute.xlu0 %317
        %vm321 = vcmask 113664
        %v322 = vsel %vm321, %v316, 0.0
        %vm323 = vcmask 111616
        %v324 = vsel %vm323, %v318, 0.0
        %v325 = vadd.f32 %v322, %v324
        %326 = vadd.xlane.f32.xlu0 %v325
        %v327 = vpop.xlane.xlu0 %326
        %v328 = vrot.slane %v327, 4
        %v329 = vadd.f32 %v327, %v328
        %v330 = vrot.slane %v329, 2
        %v331 = vadd.f32 %v329, %v330
        %v332 = vrot.slane %v331, 1
        %v333 = vadd.f32 %v331, %v332
        %s334 = vtos %v333
        %v335 = vstv %s334
        %336 = vst [vmem:[%s201] sm:$0xff] %v335
        %s337 = sand.u32 %s82, 1
        %s338 = scalar_lea.sflag [#allocation4], %s337
        %s339 = sand.u32 %s82, 1
        %s340 = smul.addr %s339, 8
        %s341 = scalar_lea.vmem [#allocation7], %s340
        // Predicated region
        $region37: #{tpu_custom_call.1} parent=27 // pred_check
          %p342 = pneg %p92
        $region38: #{tpu_custom_call.1} parent=27 // pred_check_branch
          %344 = sbr.rel (%p342) target = $region40
        $region39: #{tpu_custom_call.1} parent=27 // pred_region
          %s346 = ssub.s32 128, 128
          %347 = vsyncadd %s338, %s346
          %s348 = smul.addr %s22, 128
          %s349 = scalar_lea.hbm %s2, %s348
          %s351 = sshll.u32 %s341, 4
          %s352 = int_to_ptr.vmem [resolvable:$true] %s351
          %354 = dma.vmem_to_hbm [thread:$0]  %s352, 128, %s349, %s338
        $region40: #{tpu_custom_call.1} parent=27 // pred_fallthru
          _
      $region28: #{tpu_custom_call.1} parent=5 // pred_fallthru
        _
      %p355 = scmp.le.s32.totalorder 2, %s17
      // Predicated region
      $region41: #{tpu_custom_call.1} parent=5 // pred_check
        %p356 = pneg %p355
      $region42: #{tpu_custom_call.1} parent=5 // pred_check_branch
        %358 = sbr.rel (%p356) target = $region44
      $region43: #{tpu_custom_call.1} parent=5 // pred_region
        %s359 = ssub.s32 %s17, 2
        // Predicated region
        $region45: #{tpu_custom_call.1} parent=43 // pred_check
          %p360 = pneg %p98
        $region46: #{tpu_custom_call.1} parent=43 // pred_check_branch
          %362 = sbr.rel (%p360) target = $region48
        $region47: #{tpu_custom_call.1} parent=43 // pred_region
          %s363 = sand.u32 %s83, 1
          %s364 = scalar_lea.sflag [#allocation4], %s363
          %s365 = sand.u32 %s83, 1
          %s366 = smul.addr %s365, 8
          %s367 = scalar_lea.vmem [#allocation7], %s366
          %368 = dma.done %s364, 128
        $region48: #{tpu_custom_call.1} parent=43 // pred_fallthru
          _
      $region44: #{tpu_custom_call.1} parent=5 // pred_fallthru
        _
    $region6: #{tpu_custom_call.1} parent=1 // loop_footer
      %s21 = sadd.s32 1, %s17
    $region7: #{tpu_custom_call.1} parent=1 // loop_footer_branch
      %16 = sbr.rel target = $region3
    $region8: #{tpu_custom_call.1} parent=1 // loop_exit
      _
    %369 = vsyncpa [#allocation3], 1
    %s370 = scalar_lea.sflag [#allocation3], 1
    %371 = vsyncpa %s370, 1
    %372 = vsyncpa [#allocation6], 1
    %s373 = scalar_lea.sflag [#allocation6], 1
    %374 = vsyncpa %s373, 1
    %375 = vsyncpa [#allocation4], 1
    %s376 = scalar_lea.sflag [#allocation4], 1
    %377 = vsyncpa %s376, 1

</llo_original>
